<compile_context>
chip_gen: v6e
topology: v6e:2x2x1
jax: 0.10.0
libtpu: 0.0.40
codegen_flags: <defaults>
</compile_context>

<pallas_src>
import jax
import jax.numpy as jnp
from jax.experimental import pallas as pl
from jax.experimental.pallas import tpu as pltpu


def _make_jsd_kernel(tile_b, true_b, needs_mask):
    """Kernel for one batch tile: out_ref[0,0] = sum_rows sum_c m*(2*log m - logp1 - logp2)."""

    def kernel(x1_ref, x2_ref, out_ref):
        x1 = x1_ref[...].astype(jnp.float32)
        x2 = x2_ref[...].astype(jnp.float32)

        # Stable softmax pieces with a SINGLE exp pass per input:
        #   t = x - max; e = exp(t); s = sum(e); p = e/s; logp = t - log(s)
        mx1 = jnp.max(x1, axis=-1, keepdims=True)
        t1 = x1 - mx1
        e1 = jnp.exp(t1)
        s1 = jnp.sum(e1, axis=-1, keepdims=True)
        p1 = e1 * pl.reciprocal(s1, approx=False)   # exact recip keeps ~1e-7 acc
        logs1 = jnp.log(s1)

        mx2 = jnp.max(x2, axis=-1, keepdims=True)
        t2 = x2 - mx2
        e2 = jnp.exp(t2)
        s2 = jnp.sum(e2, axis=-1, keepdims=True)
        p2 = e2 * pl.reciprocal(s2, approx=False)
        logs2 = jnp.log(s2)

        mix = 0.5 * (p1 + p2)
        # Guard: mix can underflow to exactly 0 for extreme logits; PyTorch
        # kl_div zero-fills elements where target == 0, so mask them here too.
        pos = mix > 0.0
        log_mix = jnp.log(jnp.where(pos, mix, 1.0))

        # Per-row reductions; logp1/logp2 are never materialized as full tiles:
        #   sum_c mix*logp_k = sum_c mix*t_k - log(s_k) * sum_c mix
        row_mix = jnp.sum(mix, axis=-1, keepdims=True)
        row_mlogm = jnp.sum(jnp.where(pos, mix * log_mix, 0.0),
                            axis=-1, keepdims=True)
        row_mlogp1 = jnp.sum(mix * t1, axis=-1, keepdims=True) - logs1 * row_mix
        row_mlogp2 = jnp.sum(mix * t2, axis=-1, keepdims=True) - logs2 * row_mix

        row_contrib = 2.0 * row_mlogm - row_mlogp1 - row_mlogp2   # (tile_b, 1)

        if needs_mask:
            # Tail of the last (partial) tile: rows with global index >= B
            # contribute nothing (OOB block contents are row-local garbage;
            # select() does not propagate it).
            row0 = pl.program_id(0) * tile_b
            row_ids = row0 + jax.lax.broadcasted_iota(jnp.int32, (tile_b, 1), 0)
            row_contrib = jnp.where(row_ids < true_b, row_contrib, 0.0)

        out_ref[0, 0] = jnp.sum(row_contrib)

    return kernel


def _vmem_capacity_bytes():
    try:
        return int(pltpu.get_tpu_info().vmem_capacity_bytes)
    except Exception:
        return 64 * 1024 * 1024   # conservative: v7x per-TensorCore VMEM


def _choose_tile_b(B, C, itemsize, budget_bytes):
    # Peak VMEM ≈ 2 inputs x 2 pipeline buffers (input dtype) plus ~10
    # tile-sized f32 intermediates inside the body -> budget the whole thing,
    # not just the DMA buffers.
    per_row_bytes = 4 * C * itemsize + 10 * C * 4
    tile = max(1, budget_bytes // per_row_bytes)
    if tile >= B:
        return B                              # single full-extent block
    # Sublane rounding per dtype: f32 packs 8 sublanes, bf16 16, int8/fp8 32.
    sub = {4: 8, 2: 16, 1: 32}.get(itemsize, 8)
    tile = max(sub, (tile // sub) * sub)
    if tile >= B:
        return B
    return tile


def jsd_train(net_1_logits, net_2_logits, *, tile_b=None):
    """Pallas-backed JSD_Train.forward. Inputs: (B, C) logits. Returns scalar f32."""
    assert net_1_logits.shape == net_2_logits.shape
    B, C = net_1_logits.shape
    itemsize = jnp.dtype(net_1_logits.dtype).itemsize

    phys = _vmem_capacity_bytes()
    footprint_budget = int(phys * 0.60)
    vmem_limit = min(int(phys * 0.85), 112 * 1024 * 1024)

    if tile_b is None:
        tile_b = _choose_tile_b(B, C, itemsize, footprint_budget)
    tile_b = int(min(tile_b, B))
    num_tiles = pl.cdiv(B, tile_b)
    needs_mask = (B % tile_b) != 0            # tail rows masked in-kernel, no pad copy

    kernel = _make_jsd_kernel(tile_b, B, needs_mask)

    # Memory-bound kernel hint: ~3 transcendentals/elem (2 exp + logs), HBM
    # traffic = both logit tensors once + tiny partials output.
    cost = pl.CostEstimate(
        flops=10 * B * C,
        transcendentals=3 * B * C,
        bytes_accessed=2 * B * C * itemsize + num_tiles * 4,
    )

    partials = pl.pallas_call(
        kernel,
        out_shape=jax.ShapeDtypeStruct((num_tiles, 1), jnp.float32),
        grid=(num_tiles,),
        in_specs=[
            pl.BlockSpec((tile_b, C), lambda i: (i, 0)),
            pl.BlockSpec((tile_b, C), lambda i: (i, 0)),
        ],
        # Scalar partial per tile -> SMEM (avoids a masked 1-lane VMEM store).
        out_specs=pl.BlockSpec(
            (1, 1), lambda i: (i, 0), memory_space=pltpu.MemorySpace.SMEM
        ),
        compiler_params=pltpu.CompilerParams(
            dimension_semantics=("parallel",),
            vmem_limit_bytes=vmem_limit,
        ),
        cost_estimate=cost,
    )(net_1_logits, net_2_logits)

    # 'batchmean' over the ORIGINAL batch, times the outer 0.5.
    return 0.5 * jnp.sum(partials) / jnp.float32(B)


def _jsd_reference(x1, x2):
    # Pure-JAX reference for a sanity check.
    logp1 = jax.nn.log_softmax(x1.astype(jnp.float32), axis=1)
    logp2 = jax.nn.log_softmax(x2.astype(jnp.float32), axis=1)
    p1, p2 = jnp.exp(logp1), jnp.exp(logp2)
    m = 0.5 * (p1 + p2)
    logm = jnp.log(m)
    B = x1.shape[0]
    kl1 = jnp.sum(m * (logm - logp1)) / B
    kl2 = jnp.sum(m * (logm - logp2)) / B
    return 0.5 * (kl1 + kl2)


if __name__ == "__main__":
    key = jax.random.PRNGKey(0)
    k1, k2 = jax.random.split(key)

    # Small shapes consistent with the module: batch=8 rows, 32 classes.
    B, C = 8, 32
    net_1_logits = jax.random.normal(k1, (B, C), dtype=jnp.float32)
    net_2_logits = jax.random.normal(k2, (B, C), dtype=jnp.float32)

    loss = jax.block_until_ready(jsd_train(net_1_logits, net_2_logits))
    ref = _jsd_reference(net_1_logits, net_2_logits)
    assert jnp.allclose(loss, ref, atol=1e-5, rtol=1e-5), (loss, ref)

    # Multi-tile grid with a PARTIAL last tile (B=20, tile_b=8 -> grid=(3,),
    # 4 tail rows masked in-kernel) — exercises the no-pad path.
    k3, k4 = jax.random.split(k2)
    Bt, Ct = 20, 32
    a = jax.random.normal(k3, (Bt, Ct), dtype=jnp.float32)
    b = jax.random.normal(k4, (Bt, Ct), dtype=jnp.float32)
    loss_t = jax.block_until_ready(jsd_train(a, b, tile_b=8))
    ref_t = _jsd_reference(a, b)
    assert jnp.allclose(loss_t, ref_t, atol=1e-5, rtol=1e-5), (loss_t, ref_t)

    print("KERNEL_OK")
</pallas_src>

<mosaic_0001>
module attributes {stable_mosaic.version = 11 : i64} {
  func.func @kernel(%arg0: i32, %arg1: memref<8x32xf32, #tpu.memory_space<vmem>>, %arg2: memref<8x32xf32, #tpu.memory_space<vmem>>, %arg3: memref<1x1xf32, #tpu.memory_space<smem>>) attributes {dimension_semantics = [#tpu.dimension_semantics<parallel>], iteration_bounds = array<i64: 1>, scalar_prefetch = 0 : i64, scratch_operands = 0 : i64, tpu.core_type = #tpu.core_type<tc>, window_params = [{transform_indices = @transform_0, window_bounds = array<i64: 8, 32>}, {transform_indices = @transform_1, window_bounds = array<i64: 8, 32>}, {transform_indices = @transform_2, window_bounds = array<i64: 1, 1>}]} {
    %c0 = arith.constant 0 : index
    %c0_0 = arith.constant 0 : index
    %0 = vector.load %arg1[%c0, %c0_0] : memref<8x32xf32, #tpu.memory_space<vmem>>, vector<8x32xf32>
    %c0_1 = arith.constant 0 : index
    %c0_2 = arith.constant 0 : index
    %1 = vector.load %arg2[%c0_1, %c0_2] : memref<8x32xf32, #tpu.memory_space<vmem>>, vector<8x32xf32>
    %cst = arith.constant dense<0xFF800000> : vector<8xf32>
    %2 = vector.multi_reduction <maximumf>, %0, %cst [1] : vector<8x32xf32> to vector<8xf32>
    %3 = vector.shape_cast %2 : vector<8xf32> to vector<8x1xf32>
    %4 = vector.broadcast %3 : vector<8x1xf32> to vector<8x32xf32>
    %5 = arith.subf %0, %4 : vector<8x32xf32>
    %6 = math.exp %5 : vector<8x32xf32>
    %cst_3 = arith.constant dense<0.000000e+00> : vector<8xf32>
    %7 = vector.multi_reduction <add>, %6, %cst_3 [1] : vector<8x32xf32> to vector<8xf32>
    %8 = vector.shape_cast %7 : vector<8xf32> to vector<8x1xf32>
    %9 = tpu.reciprocal %8 : vector<8x1xf32> -> vector<8x1xf32>
    %10 = vector.broadcast %9 : vector<8x1xf32> to vector<8x32xf32>
    %11 = arith.mulf %6, %10 : vector<8x32xf32>
    %12 = math.log %8 : vector<8x1xf32>
    %cst_4 = arith.constant dense<0xFF800000> : vector<8xf32>
    %13 = vector.multi_reduction <maximumf>, %1, %cst_4 [1] : vector<8x32xf32> to vector<8xf32>
    %14 = vector.shape_cast %13 : vector<8xf32> to vector<8x1xf32>
    %15 = vector.broadcast %14 : vector<8x1xf32> to vector<8x32xf32>
    %16 = arith.subf %1, %15 : vector<8x32xf32>
    %17 = math.exp %16 : vector<8x32xf32>
    %cst_5 = arith.constant dense<0.000000e+00> : vector<8xf32>
    %18 = vector.multi_reduction <add>, %17, %cst_5 [1] : vector<8x32xf32> to vector<8xf32>
    %19 = vector.shape_cast %18 : vector<8xf32> to vector<8x1xf32>
    %20 = tpu.reciprocal %19 : vector<8x1xf32> -> vector<8x1xf32>
    %21 = vector.broadcast %20 : vector<8x1xf32> to vector<8x32xf32>
    %22 = arith.mulf %17, %21 : vector<8x32xf32>
    %23 = math.log %19 : vector<8x1xf32>
    %24 = arith.addf %11, %22 : vector<8x32xf32>
    %cst_6 = arith.constant 5.000000e-01 : f32
    %25 = vector.broadcast %cst_6 : f32 to vector<8x32xf32>
    %26 = arith.mulf %25, %24 : vector<8x32xf32>
    %cst_7 = arith.constant 0.000000e+00 : f32
    %27 = vector.broadcast %cst_7 : f32 to vector<8x32xf32>
    %28 = arith.cmpf ogt, %26, %27 : vector<8x32xf32>
    %cst_8 = arith.constant 1.000000e+00 : f32
    %29 = vector.broadcast %cst_8 : f32 to vector<8x32xf32>
    %30 = arith.select %28, %26, %29 : vector<8x32xi1>, vector<8x32xf32>
    %31 = math.log %30 : vector<8x32xf32>
    %cst_9 = arith.constant dense<0.000000e+00> : vector<8xf32>
    %32 = vector.multi_reduction <add>, %26, %cst_9 [1] : vector<8x32xf32> to vector<8xf32>
    %33 = vector.shape_cast %32 : vector<8xf32> to vector<8x1xf32>
    %34 = arith.mulf %26, %31 : vector<8x32xf32>
    %cst_10 = arith.constant 0.000000e+00 : f32
    %35 = vector.broadcast %cst_10 : f32 to vector<8x32xf32>
    %36 = arith.select %28, %34, %35 : vector<8x32xi1>, vector<8x32xf32>
    %cst_11 = arith.constant dense<0.000000e+00> : vector<8xf32>
    %37 = vector.multi_reduction <add>, %36, %cst_11 [1] : vector<8x32xf32> to vector<8xf32>
    %38 = vector.shape_cast %37 : vector<8xf32> to vector<8x1xf32>
    %39 = arith.mulf %26, %5 : vector<8x32xf32>
    %cst_12 = arith.constant dense<0.000000e+00> : vector<8xf32>
    %40 = vector.multi_reduction <add>, %39, %cst_12 [1] : vector<8x32xf32> to vector<8xf32>
    %41 = vector.shape_cast %40 : vector<8xf32> to vector<8x1xf32>
    %42 = arith.mulf %12, %33 : vector<8x1xf32>
    %43 = arith.subf %41, %42 : vector<8x1xf32>
    %44 = arith.mulf %26, %16 : vector<8x32xf32>
    %cst_13 = arith.constant dense<0.000000e+00> : vector<8xf32>
    %45 = vector.multi_reduction <add>, %44, %cst_13 [1] : vector<8x32xf32> to vector<8xf32>
    %46 = vector.shape_cast %45 : vector<8xf32> to vector<8x1xf32>
    %47 = arith.mulf %23, %33 : vector<8x1xf32>
    %48 = arith.subf %46, %47 : vector<8x1xf32>
    %cst_14 = arith.constant 2.000000e+00 : f32
    %49 = vector.broadcast %cst_14 : f32 to vector<8x1xf32>
    %50 = arith.mulf %49, %38 : vector<8x1xf32>
    %51 = arith.subf %50, %43 : vector<8x1xf32>
    %52 = arith.subf %51, %48 : vector<8x1xf32>
    %53 = vector.shape_cast %52 : vector<8x1xf32> to vector<1x8x1xf32>
    %cst_15 = arith.constant dense<0.000000e+00> : vector<1xf32>
    %54 = vector.multi_reduction <add>, %53, %cst_15 [1, 2] : vector<1x8x1xf32> to vector<1xf32>
    %55 = vector.shape_cast %54 : vector<1xf32> to vector<1x1x1xf32>
    %56 = vector.extract %55[0, 0, 0] : f32 from vector<1x1x1xf32>
    %c0_16 = arith.constant 0 : index
    %c0_17 = arith.constant 0 : index
    %57 = memref.load %arg3[%c0_16, %c0_17] : memref<1x1xf32, #tpu.memory_space<smem>>
    memref.store %56, %arg3[%c0_16, %c0_17] : memref<1x1xf32, #tpu.memory_space<smem>>
    return
  }
  func.func @transform_0(%arg0: i32) -> (i32, i32) {
    %c0_i32 = arith.constant 0 : i32
    %c0_i32_0 = arith.constant 0 : i32
    return %arg0, %c0_i32 : i32, i32
  }
  func.func @transform_1(%arg0: i32) -> (i32, i32) {
    %c0_i32 = arith.constant 0 : i32
    %c0_i32_0 = arith.constant 0 : i32
    return %arg0, %c0_i32 : i32, i32
  }
  func.func @transform_2(%arg0: i32) -> (i32, i32) {
    %c0_i32 = arith.constant 0 : i32
    %c0_i32_0 = arith.constant 0 : i32
    return %arg0, %c0_i32 : i32, i32
  }
}

</mosaic_0001>

<llo_original>
// kernel: tpu_custom_call.1
$region0: #{tpu_custom_call.1}
  #allocation0 [shape = 'u32[]', space=smem, size = 0x4, offset = 0x4, fixed_abs, tag = 'smem constant byte address 0x4 - core index']
  #allocation1 [shape = 'u32[144,128]{1,0:T(1,128)}', space=vmem, size = 0x12000, scoped, tag = 'internal scratch']
  %s0 = inlined_call_operand.hbm [shape: f32[8,32], index: 0, kind: input, shape index: {}]
  %s1 = inlined_call_operand.hbm [shape: f32[8,32], index: 1, kind: input, shape index: {}]
  %s2 = inlined_call_operand.hbm [shape: f32[1,1], index: 2, kind: output, shape index: {}]
  %s3 = sld [smem:[#allocation0]]
  $region26: #{tpu_custom_call.1} parent=0
    _
  %s5 = ssub.s32 1, %s3
  %s6 = scalar_select 0, %s5, %s3
  $region1: #{tpu_custom_call.1} parent=0
    #allocation2 [shape = 'u8[4096]{0}', space=vmem, size = 0x1000, scoped, tag = 'input window, operand 0, single buffered']
    #allocation3 [shape = 's32[1]{0}', space=sflag, size = 0x4, scoped, tag = 'scoped memory for tpu_custom_call.1']
    #allocation4 [shape = 's32[1]{0}', space=sflag, size = 0x4, scoped, tag = 'scoped memory for tpu_custom_call.1']
    #allocation5 [shape = 'u8[4096]{0}', space=vmem, size = 0x1000, scoped, tag = 'input window, operand 1, single buffered']
    #allocation6 [shape = 's32[1]{0}', space=sflag, size = 0x4, scoped, tag = 'scoped memory for tpu_custom_call.1']
    #allocation7 [shape = 'u8[512]{0}', space=smem, size = 0x200, scoped, tag = 'output window, operand 0, single buffered']
    %7 = vsyncpa [#allocation3], 0
    %8 = vsyncpa [#allocation6], 0
    %9 = vsyncpa [#allocation4], 0
    // Predicated region
    $region2: #{tpu_custom_call.1} parent=1 // pred_check
      _
    $region3: #{tpu_custom_call.1} parent=1 // pred_check_branch
      %11 = sbr.rel (0) target = $region5
    $region4: #{tpu_custom_call.1} parent=1 // pred_region
      %s13 = ssub.s32 128, 128
      %14 = vsyncadd [#allocation3], %s13
      %s16 = sshll.u32 [#allocation2], 4
      %s17 = int_to_ptr.vmem [resolvable:$true] %s16
      %19 = dma.hbm_to_vmem [thread:$0]  %s0, 128, %s17, [#allocation3]
    $region5: #{tpu_custom_call.1} parent=1 // pred_fallthru
      _
    // Predicated region
    $region6: #{tpu_custom_call.1} parent=1 // pred_check
      _
    $region7: #{tpu_custom_call.1} parent=1 // pred_check_branch
      %21 = sbr.rel (0) target = $region9
    $region8: #{tpu_custom_call.1} parent=1 // pred_region
      %s23 = ssub.s32 128, 128
      %24 = vsyncadd [#allocation6], %s23
      %s26 = sshll.u32 [#allocation5], 4
      %s27 = int_to_ptr.vmem [resolvable:$true] %s26
      %29 = dma.hbm_to_vmem [thread:$0]  %s1, 128, %s27, [#allocation6]
    $region9: #{tpu_custom_call.1} parent=1 // pred_fallthru
      _
    // Predicated region
    $region10: #{tpu_custom_call.1} parent=1 // pred_check
      _
    $region11: #{tpu_custom_call.1} parent=1 // pred_check_branch
      %31 = sbr.rel (0) target = $region13
    $region12: #{tpu_custom_call.1} parent=1 // pred_region
      %32 = dma.done [#allocation3], 128
    $region13: #{tpu_custom_call.1} parent=1 // pred_fallthru
      _
    // Predicated region
    $region14: #{tpu_custom_call.1} parent=1 // pred_check
      _
    $region15: #{tpu_custom_call.1} parent=1 // pred_check_branch
      %34 = sbr.rel (0) target = $region17
    $region16: #{tpu_custom_call.1} parent=1 // pred_region
      %35 = dma.done [#allocation6], 128
    $region17: #{tpu_custom_call.1} parent=1 // pred_fallthru
      _
    %v36 = vld [vmem:[#allocation2] sm:$0xff]
    %v37 = vld [vmem:[#allocation5] sm:$0xff]
    %vm38 = vcmask 261120
    %v39 = vsel %vm38, %v36, -inf
    %40 = vmax.xlane.f32.xlu0 %v39
    %v41 = vpop.xlane.xlu0 %40
    %v42 = vsub.f32 %v36, %v41
    %v43 = vmul.f32 %v42, 1.442695
    %v44 = vpow.pop %v43
    %v45 = vsel %vm38, %v44, 0.0
    %46 = vadd.xlane.f32.xlu0 %v45
    %v47 = vpop.xlane.xlu0 %46
    %v48 = vrcp.pop %v47
    %v49 = vmul.f32 %v44, %v48
    %v50 = vlog2.pop %v47
    %v51 = vmul.f32 %v50, 0.6931472
    %v52 = vsel %vm38, %v37, -inf
    %53 = vmax.xlane.f32.xlu0 %v52
    %v54 = vpop.xlane.xlu0 %53
    %v55 = vsub.f32 %v37, %v54
    %v56 = vmul.f32 %v55, 1.442695
    %v57 = vpow.pop %v56
    %v58 = vsel %vm38, %v57, 0.0
    %59 = vadd.xlane.f32.xlu0 %v58
    %v60 = vpop.xlane.xlu0 %59
    %v61 = vrcp.pop %v60
    %v62 = vmul.f32 %v57, %v61
    %v63 = vlog2.pop %v60
    %v64 = vmul.f32 %v63, 0.6931472
    %v65 = vadd.f32 %v49, %v62
    %v66 = vmul.f32 %v65, 0.5
    %vm67 = vcmp.gt.f32.partialorder %v66, 0.0
    %v68 = vsel %vm67, %v66, 1.0
    %v69 = vlog2.pop %v68
    %v70 = vmul.f32 %v69, 0.6931472
    %v71 = vsel %vm38, %v66, 0.0
    %72 = vadd.xlane.f32.xlu0 %v71
    %v73 = vpop.xlane.xlu0 %72
    %v74 = vmul.f32 %v66, %v70
    %v75 = vsel %vm67, %v74, 0.0
    %v76 = vsel %vm38, %v75, 0.0
    %77 = vadd.xlane.f32.xlu0 %v76
    %v78 = vpop.xlane.xlu0 %77
    %v79 = vmul.f32 %v66, %v42
    %v80 = vsel %vm38, %v79, 0.0
    %81 = vadd.xlane.f32.xlu0 %v80
    %v82 = vpop.xlane.xlu0 %81
    %v83 = vmul.f32 %v51, %v73
    %v84 = vsub.f32 %v82, %v83
    %v85 = vmul.f32 %v66, %v55
    %v86 = vsel %vm38, %v85, 0.0
    %87 = vadd.xlane.f32.xlu0 %v86
    %v88 = vpop.xlane.xlu0 %87
    %v89 = vmul.f32 %v64, %v73
    %v90 = vsub.f32 %v88, %v89
    %v91 = vmul.f32 %v78, 2.0
    %v92 = vsub.f32 %v91, %v84
    %v93 = vsub.f32 %v92, %v90
    %vm94 = vcmask 7168
    %v95 = vsel %vm94, %v93, 0.0
    %96 = vadd.xlane.f32.xlu0 %v95
    %v97 = vpop.xlane.xlu0 %96
    %v98 = vrot.slane %v97, 4
    %v99 = vadd.f32 %v97, %v98
    %v100 = vrot.slane %v99, 2
    %v101 = vadd.f32 %v99, %v100
    %v102 = vrot.slane %v101, 1
    %v103 = vadd.f32 %v101, %v102
    %s104 = vtos %v103
    %s105 = scalar_lea.smem [#allocation7], 0
    %106 = sst [smem:[%s105]] %s104
    // Predicated region
    $region18: #{tpu_custom_call.1} parent=1 // pred_check
      _
    $region19: #{tpu_custom_call.1} parent=1 // pred_check_branch
      %108 = sbr.rel (0) target = $region21
    $region20: #{tpu_custom_call.1} parent=1 // pred_region
      %s110 = ssub.s32 16, 16
      %111 = vsyncadd [#allocation4], %s110
      %114 = dma.smem_to_hbm [#allocation7], 16, %s2, [#allocation4]
    $region21: #{tpu_custom_call.1} parent=1 // pred_fallthru
      _
    // Predicated region
    $region22: #{tpu_custom_call.1} parent=1 // pred_check
      _
    $region23: #{tpu_custom_call.1} parent=1 // pred_check_branch
      %116 = sbr.rel (0) target = $region25
    $region24: #{tpu_custom_call.1} parent=1 // pred_region
      %117 = dma.done [#allocation4], 16
    $region25: #{tpu_custom_call.1} parent=1 // pred_fallthru
      _
    %118 = sfence
    %119 = vsyncpa [#allocation3], 1
    %120 = vsyncpa [#allocation6], 1
    %121 = vsyncpa [#allocation4], 1

</llo_original>
